<compile_context>
chip_gen: v6e
topology: v6e:2x2x1
jax: 0.10.0
libtpu: 0.0.40
codegen_flags: <defaults>
</compile_context>

<pallas_src>
import jax
import jax.numpy as jnp
from jax.experimental import pallas as pl
from jax.experimental.pallas import tpu as pltpu

_VMEM_TABLE_BUDGET = 12 * 1024 * 1024   # combined resident-table cap (v7x-safe)


def _round_up(a, b):
    return (a + b - 1) // b * b


def _entity_gather_kernel(idx_ref, t1_ref, t2_ref, o1_ref, o2_ref):
    # idx_ref : (ROWS, 1) int32  -- this step's row indices
    # t1_ref  : (V, D)    f32    -- embedding1.weight, VMEM-resident
    # t2_ref  : (V, D)    f32    -- embedding2.weight, VMEM-resident
    # o1_ref  : (ROWS, D) f32
    # o2_ref  : (ROWS, D) f32
    rows = idx_ref.shape[0]
    v = t1_ref.shape[0]

    ids = idx_ref[...]                                            # (ROWS, 1)
    iota = jax.lax.broadcasted_iota(jnp.int32, (rows, v), 1)      # (ROWS, V)
    onehot = (ids == iota).astype(jnp.float32)                    # exact 0/1

    # One-hot x table on the MXU: exact row gather, one dense store per output.
    o1_ref[...] = jnp.dot(onehot, t1_ref[...],
                          preferred_element_type=jnp.float32,
                          precision=jax.lax.Precision.HIGHEST)
    o2_ref[...] = jnp.dot(onehot, t2_ref[...],
                          preferred_element_type=jnp.float32,
                          precision=jax.lax.Precision.HIGHEST)


def entity_encoder_forward(x_input, table1, table2, hidden_size, num_layers,
                           *, rows_per_step=512):
    """Pallas equivalent of EntityEncoder.forward.

    x_input : integer indices, shape (B, S) (or any shape)
    table1  : (input_size, hidden_size * num_layers) f32  (embedding1.weight)
    table2  : (input_size, hidden_size * num_layers) f32  (embedding2.weight)
    returns (hc, hx), each (num_layers, -1, hidden_size)
    """
    v, d = table1.shape
    assert d == hidden_size * num_layers
    assert table2.shape == (v, d)

    table1 = table1.astype(jnp.float32)
    table2 = table2.astype(jnp.float32)

    tables_bytes = 2 * v * d * 4
    assert tables_bytes <= _VMEM_TABLE_BUDGET, (
        "vocab too large for the VMEM-resident path; see TODO(synk) above")

    # Flatten + clamp indices (torch nn.Embedding would raise on OOB; we clamp).
    idx = jnp.clip(x_input.reshape(-1).astype(jnp.int32), 0, v - 1)
    n = idx.shape[0]

    rows = min(rows_per_step, _round_up(n, 8))     # output rows per grid step
    n_pad = _round_up(n, rows)
    idx2d = jnp.pad(idx, (0, n_pad - n)).reshape(n_pad, 1)

    grid = (n_pad // rows,)

    # Explicit scoped-VMEM limit: resident tables (conservatively x2 buffers),
    # double-buffered output blocks, plus compiler scratch headroom.
    out_block_bytes = 2 * rows * d * 4
    vmem_limit = min(48 << 20,
                     max(16 << 20,
                         2 * tables_bytes + 2 * out_block_bytes + (4 << 20)))

    emb1, emb2 = pl.pallas_call(
        _entity_gather_kernel,
        out_shape=(jax.ShapeDtypeStruct((n_pad, d), jnp.float32),
                   jax.ShapeDtypeStruct((n_pad, d), jnp.float32)),
        grid=grid,
        in_specs=[
            pl.BlockSpec((rows, 1), lambda i: (i, 0)),   # per-step indices
            pl.BlockSpec((v, d), lambda i: (0, 0)),      # resident table 1
            pl.BlockSpec((v, d), lambda i: (0, 0)),      # resident table 2
        ],
        out_specs=(
            pl.BlockSpec((rows, d), lambda i: (i, 0)),
            pl.BlockSpec((rows, d), lambda i: (i, 0)),
        ),
        compiler_params=pltpu.CompilerParams(
            dimension_semantics=("parallel",),
            vmem_limit_bytes=int(vmem_limit),
        ),
    )(idx2d, table1, table2)

    emb1 = emb1[:n]                                  # contiguous row slice only
    emb2 = emb2[:n]

    # Exactly mirrors torch: embedding(x).view(num_layers, -1, hidden_size)
    # (a raw row-major reshape of the (N, L*H) lookup result).
    hc = emb1.reshape(num_layers, -1, hidden_size)
    hx = emb2.reshape(num_layers, -1, hidden_size)
    return hc, hx


if __name__ == "__main__":
    # Small shapes consistent with the module.
    input_size = 16      # vocab size (num_embeddings)
    hidden_size = 32
    num_layers = 3
    batch, seq = 2, 8    # x_input is 2D (batch, seq) of integer indices

    key = jax.random.PRNGKey(0)
    k_idx, k_t1, k_t2 = jax.random.split(key, 3)

    # Deterministic parameter init: nn.Embedding weights ~ N(0, 1).
    table1 = jax.random.normal(
        k_t1, (input_size, hidden_size * num_layers), dtype=jnp.float32)
    table2 = jax.random.normal(
        k_t2, (input_size, hidden_size * num_layers), dtype=jnp.float32)

    x_input = jax.random.randint(
        k_idx, (batch, seq), minval=0, maxval=input_size, dtype=jnp.int32)

    fwd = jax.jit(entity_encoder_forward,
                  static_argnames=("hidden_size", "num_layers"))
    hc, hx = fwd(x_input, table1, table2,
                 hidden_size=hidden_size, num_layers=num_layers)
    jax.block_until_ready((hc, hx))

    # Pure-JAX reference (plain gather + reshape).
    ref_hc = table1[x_input.reshape(-1)].reshape(num_layers, -1, hidden_size)
    ref_hx = table2[x_input.reshape(-1)].reshape(num_layers, -1, hidden_size)
    assert hc.shape == (num_layers, batch * seq, hidden_size)
    assert hx.shape == (num_layers, batch * seq, hidden_size)
    assert jnp.allclose(hc, ref_hc, rtol=1e-6, atol=1e-6)
    assert jnp.allclose(hx, ref_hx, rtol=1e-6, atol=1e-6)

    print("KERNEL_OK")
</pallas_src>

<mosaic_0001>
module attributes {stable_mosaic.version = 11 : i64} {
  func.func @_entity_gather_kernel(%arg0: i32, %arg1: memref<16x1xi32, #tpu.memory_space<vmem>>, %arg2: memref<16x96xf32, #tpu.memory_space<vmem>>, %arg3: memref<16x96xf32, #tpu.memory_space<vmem>>, %arg4: memref<16x96xf32, #tpu.memory_space<vmem>>, %arg5: memref<16x96xf32, #tpu.memory_space<vmem>>) attributes {dimension_semantics = [#tpu.dimension_semantics<parallel>], iteration_bounds = array<i64: 1>, scalar_prefetch = 0 : i64, scratch_operands = 0 : i64, tpu.core_type = #tpu.core_type<tc>, window_params = [{transform_indices = @transform_0, window_bounds = array<i64: 16, 1>}, {pipeline_mode = #tpu.pipeline_mode<synchronous>, transform_indices = @transform_1, window_bounds = array<i64: 16, 96>}, {pipeline_mode = #tpu.pipeline_mode<synchronous>, transform_indices = @transform_2, window_bounds = array<i64: 16, 96>}, {transform_indices = @transform_3, window_bounds = array<i64: 16, 96>}, {transform_indices = @transform_4, window_bounds = array<i64: 16, 96>}]} {
    %c0 = arith.constant 0 : index
    %c0_0 = arith.constant 0 : index
    %0 = vector.load %arg1[%c0, %c0_0] : memref<16x1xi32, #tpu.memory_space<vmem>>, vector<16x1xi32>
    %1 = tpu.iota {dimensions = array<i32: 1>} : vector<16x16xi32>
    %2 = vector.broadcast %0 : vector<16x1xi32> to vector<16x16xi32>
    %3 = arith.cmpi eq, %2, %1 : vector<16x16xi32>
    %4 = arith.extui %3 : vector<16x16xi1> to vector<16x16xi32>
    %5 = arith.sitofp %4 : vector<16x16xi32> to vector<16x16xf32>
    %c0_1 = arith.constant 0 : index
    %c0_2 = arith.constant 0 : index
    %6 = vector.load %arg2[%c0_1, %c0_2] : memref<16x96xf32, #tpu.memory_space<vmem>>, vector<16x96xf32>
    %cst = arith.constant dense<0.000000e+00> : vector<16x96xf32>
    %7 = tpu.matmul %5, %6, %cst {dimension_numbers = #tpu.dot_dimension_numbers<[1], [0], [0], [1], [0, 0, 1, 1], [], []>, precision = #tpu.contract_precision<fp32>} : vector<16x16xf32>, vector<16x96xf32>, vector<16x96xf32> -> vector<16x96xf32>
    %c0_3 = arith.constant 0 : index
    %c0_4 = arith.constant 0 : index
    %8 = vector.load %arg4[%c0_3, %c0_4] : memref<16x96xf32, #tpu.memory_space<vmem>>, vector<16x96xf32>
    tpu.vector_store %arg4[%c0_3, %c0_4], %7 {strides = array<i32>} : memref<16x96xf32, #tpu.memory_space<vmem>>, vector<16x96xf32>,
    %c0_5 = arith.constant 0 : index
    %c0_6 = arith.constant 0 : index
    %9 = vector.load %arg3[%c0_5, %c0_6] : memref<16x96xf32, #tpu.memory_space<vmem>>, vector<16x96xf32>
    %cst_7 = arith.constant dense<0.000000e+00> : vector<16x96xf32>
    %10 = tpu.matmul %5, %9, %cst_7 {dimension_numbers = #tpu.dot_dimension_numbers<[1], [0], [0], [1], [0, 0, 1, 1], [], []>, precision = #tpu.contract_precision<fp32>} : vector<16x16xf32>, vector<16x96xf32>, vector<16x96xf32> -> vector<16x96xf32>
    %c0_8 = arith.constant 0 : index
    %c0_9 = arith.constant 0 : index
    %11 = vector.load %arg5[%c0_8, %c0_9] : memref<16x96xf32, #tpu.memory_space<vmem>>, vector<16x96xf32>
    tpu.vector_store %arg5[%c0_8, %c0_9], %10 {strides = array<i32>} : memref<16x96xf32, #tpu.memory_space<vmem>>, vector<16x96xf32>,
    return
  }
  func.func @transform_0(%arg0: i32) -> (i32, i32) {
    %c0_i32 = arith.constant 0 : i32
    %c0_i32_0 = arith.constant 0 : i32
    return %arg0, %c0_i32 : i32, i32
  }
  func.func @transform_1(%arg0: i32) -> (i32, i32) {
    %c0_i32 = arith.constant 0 : i32
    %c0_i32_0 = arith.constant 0 : i32
    %c0_i32_1 = arith.constant 0 : i32
    return %c0_i32, %c0_i32_0 : i32, i32
  }
  func.func @transform_2(%arg0: i32) -> (i32, i32) {
    %c0_i32 = arith.constant 0 : i32
    %c0_i32_0 = arith.constant 0 : i32
    %c0_i32_1 = arith.constant 0 : i32
    return %c0_i32, %c0_i32_0 : i32, i32
  }
  func.func @transform_3(%arg0: i32) -> (i32, i32) {
    %c0_i32 = arith.constant 0 : i32
    %c0_i32_0 = arith.constant 0 : i32
    return %arg0, %c0_i32 : i32, i32
  }
  func.func @transform_4(%arg0: i32) -> (i32, i32) {
    %c0_i32 = arith.constant 0 : i32
    %c0_i32_0 = arith.constant 0 : i32
    return %arg0, %c0_i32 : i32, i32
  }
}

</mosaic_0001>

<llo_original>
// kernel: entity_encoder_forward.1
$region0: #{entity_encoder_forward.1}
  #allocation0 [shape = 'u32[]', space=smem, size = 0x4, offset = 0x4, fixed_abs, tag = 'smem constant byte address 0x4 - core index']
  #allocation1 [shape = 'u32[144,128]{1,0:T(1,128)}', space=vmem, size = 0x12000, scoped, tag = 'internal scratch']
  %s0 = inlined_call_operand.vmem [shape: s32[16,1], index: 0, kind: input, shape index: {}]
  %s1 = inlined_call_operand.vmem [shape: f32[16,96], index: 1, kind: input, shape index: {}]
  %s2 = inlined_call_operand.hbm [shape: f32[16,96], index: 2, kind: input, shape index: {}]
  %s3 = inlined_call_operand.vmem [shape: f32[16,96], index: 3, kind: output, shape index: {0}]
  %s4 = inlined_call_operand.vmem [shape: f32[16,96], index: 4, kind: output, shape index: {1}]
  %5 = xla_tuple %s3, %s4
  %s6 = sld [smem:[#allocation0]]
  $region34: #{entity_encoder_forward.1} parent=0
    _
  %s8 = ssub.s32 1, %s6
  %s9 = scalar_select 0, %s8, %s6
  $region1: #{entity_encoder_forward.1} parent=0
    #allocation2 [shape = 'u8[8192]{0}', space=vmem, size = 0x2000, scoped, tag = 'input window, operand 2, single buffered']
    #allocation3 [shape = 's32[1]{0}', space=sflag, size = 0x4, scoped, tag = 'scoped memory for entity_encoder_forward.1']
    %10 = vsyncpa [#allocation3], 0
    // Predicated region
    $region2: #{entity_encoder_forward.1} parent=1 // pred_check
      _
    $region3: #{entity_encoder_forward.1} parent=1 // pred_check_branch
      %12 = sbr.rel (0) target = $region5
    $region4: #{entity_encoder_forward.1} parent=1 // pred_region
      _
    $region5: #{entity_encoder_forward.1} parent=1 // pred_fallthru
      _
    // Predicated region
    $region6: #{entity_encoder_forward.1} parent=1 // pred_check
      _
    $region7: #{entity_encoder_forward.1} parent=1 // pred_check_branch
      %14 = sbr.rel (0) target = $region9
    $region8: #{entity_encoder_forward.1} parent=1 // pred_region
      _
    $region9: #{entity_encoder_forward.1} parent=1 // pred_fallthru
      _
    // Predicated region
    $region10: #{entity_encoder_forward.1} parent=1 // pred_check
      _
    $region11: #{entity_encoder_forward.1} parent=1 // pred_check_branch
      %16 = sbr.rel (0) target = $region13
    $region12: #{entity_encoder_forward.1} parent=1 // pred_region
      %s18 = ssub.s32 256, 256
      %19 = vsyncadd [#allocation3], %s18
      %s20 = sshll.u32 [#allocation2], 4
      %s21 = int_to_ptr.vmem [resolvable:$true] %s20
      %26 = dma.hbm_to_vmem [thread:$0]  %s2, 256, %s21, [#allocation3], 128, 128, 8
    $region13: #{entity_encoder_forward.1} parent=1 // pred_fallthru
      _
    // Predicated region
    $region14: #{entity_encoder_forward.1} parent=1 // pred_check
      _
    $region15: #{entity_encoder_forward.1} parent=1 // pred_check_branch
      %28 = sbr.rel (0) target = $region17
    $region16: #{entity_encoder_forward.1} parent=1 // pred_region
      %29 = dma.done [#allocation3], 256
    $region17: #{entity_encoder_forward.1} parent=1 // pred_fallthru
      _
    %v30 = vld [vmem:[%s0] sm:$0xff]
    %v31 = vld [vmem:[%s0 + $0x8] sm:$0xff]
    %v32 = vlaneseq
    %v33 = vand.u32 %v32, 127
    %34 = vset.pattern.permute.xlu0 0
    %35 = vperm.xlu0 %34, %v30
    %v36 = vpop.permute.xlu0 %35
    %37 = vset.pattern.permute.xlu0 0
    %38 = vperm.xlu0 %37, %v31
    %v39 = vpop.permute.xlu0 %38
    %vm40 = vcmp.eq.s32.totalorder %v36, %v33
    %vm41 = vcmp.eq.s32.totalorder %v39, %v33
    %v42 = vsel %vm40, 1, 0
    %v43 = vsel %vm41, 1, 0
    %v44 = vcvt.s32.f32 %v42
    %v45 = vcvt.s32.f32 %v43
    %v46 = vld [vmem:[%s1] sm:$0xff]
    %v47 = vld [vmem:[%s1 + $0x8] sm:$0xff]
    %vm48 = vcmask 130048
    %v50 = vsel %vm48, %v44, 0
    %v53 = vsel %vm48, %v45, 0
    %55 = vmatprep.subr.mxu0 0.0
    %56 = vmatpush1.msra.mxu0 0.0
    %57 = vmatprep.subr.mxu0 0.0
    %58 = vmatpush1.msra.mxu0 0.0
    %59 = vmatprep.subr.mxu0 0.0
    %60 = vmatpush1.msra.mxu0 0.0
    %61 = vmatprep.subr.mxu0 0.0
    %62 = vmatpush1.msra.mxu0 0.0
    %63 = vmatprep.subr.mxu0 0.0
    %64 = vmatpush1.msra.mxu0 0.0
    %65 = vmatprep.subr.mxu0 0.0
    %66 = vmatpush1.msra.mxu0 0.0
    %67 = vmatprep.subr.mxu0 0.0
    %68 = vmatpush1.msra.mxu0 0.0
    %69 = vmatprep.subr.mxu0 0.0
    %70 = vmatpush1.msra.mxu0 0.0
    %71 = vmatprep.subr.mxu0 0.0
    %72 = vmatpush1.msra.mxu0 0.0
    %73 = vmatprep.subr.mxu0 0.0
    %74 = vmatpush1.msra.mxu0 0.0
    %75 = vmatprep.subr.mxu0 0.0
    %76 = vmatpush1.msra.mxu0 0.0
    %77 = vmatprep.subr.mxu0 0.0
    %78 = vmatpush1.msra.mxu0 0.0
    %79 = vmatprep.subr.mxu0 0.0
    %80 = vmatpush1.msra.mxu0 0.0
    %81 = vmatprep.subr.mxu0 0.0
    %82 = vmatpush1.msra.mxu0 0.0
    %83 = vmatprep.subr.mxu0 0.0
    %v84 = vand.u32 %v47, 4294901760
    %85 = vmatpush1.msra.mxu0 %v84
    %86 = vmatprep.subr.mxu0 0.0
    %v87 = vand.u32 %v46, 4294901760
    %88 = vmatpush1.msra.mxu0 %v87
    %89 = vmatprep.subr.mxu0 0.0
    %90 = vmatpush2.msra.mxu0 0.0
    %91 = vmatprep.subr.mxu0 0.0
    %92 = vmatpush2.msra.mxu0 0.0
    %93 = vmatprep.subr.mxu0 0.0
    %94 = vmatpush2.msra.mxu0 0.0
    %95 = vmatprep.subr.mxu0 0.0
    %96 = vmatpush2.msra.mxu0 0.0
    %97 = vmatprep.subr.mxu0 0.0
    %98 = vmatpush2.msra.mxu0 0.0
    %99 = vmatprep.subr.mxu0 0.0
    %100 = vmatpush2.msra.mxu0 0.0
    %101 = vmatprep.subr.mxu0 0.0
    %102 = vmatpush2.msra.mxu0 0.0
    %103 = vmatprep.subr.mxu0 0.0
    %104 = vmatpush2.msra.mxu0 0.0
    %105 = vmatprep.subr.mxu0 0.0
    %106 = vmatpush2.msra.mxu0 0.0
    %107 = vmatprep.subr.mxu0 0.0
    %108 = vmatpush2.msra.mxu0 0.0
    %109 = vmatprep.subr.mxu0 0.0
    %110 = vmatpush2.msra.mxu0 0.0
    %111 = vmatprep.subr.mxu0 0.0
    %112 = vmatpush2.msra.mxu0 0.0
    %113 = vmatprep.subr.mxu0 0.0
    %114 = vmatpush2.msra.mxu0 0.0
    %115 = vmatprep.subr.mxu0 0.0
    %116 = vmatpush2.msra.mxu0 0.0
    %117 = vmatprep.subr.mxu0 0.0
    %118 = vmatpush2.msra.mxu0 0.0
    %119 = vmatprep.subr.mxu0 0.0
    %120 = vmatpush2.msra.mxu0 0.0
    %121 = vmatprep.mubr.f32.mxu0 0.0
    %v122 = vand.u32 %v50, 4294901760
    %v123 = vsub.f32 %v50, %v122
    %v124 = vand.u32 %v123, 4294901760
    %v125 = vsub.f32 %v123, %v124
    %v126 = vand.u32 %v125, 4294901760
    %127 = vmatmul.mubr.f32.gmra.mxu0 %v126
    %v128 = vpop.f32.mrf.mxu0
    %v129 = vadd.f32 0.0, %v128
    %v130 = vpop.f32.mrf.mxu0
    %131 = vmatprep.mubr.f32.mxu0 0.0
    %v132 = vand.u32 %v53, 4294901760
    %v133 = vsub.f32 %v53, %v132
    %v134 = vand.u32 %v133, 4294901760
    %v135 = vsub.f32 %v133, %v134
    %v136 = vand.u32 %v135, 4294901760
    %137 = vmatmul.mubr.f32.gmra.mxu0 %v136
    %v138 = vpop.f32.mrf.mxu0
    %v139 = vadd.f32 0.0, %v138
    %v140 = vpop.f32.mrf.mxu0
    %141 = vdwg.mxu0
    %142 = vmatprep.subr.mxu0 0.0
    %143 = vmatpush1.msra.mxu0 0.0
    %144 = vmatprep.subr.mxu0 0.0
    %145 = vmatpush1.msra.mxu0 0.0
    %146 = vmatprep.subr.mxu0 0.0
    %147 = vmatpush1.msra.mxu0 0.0
    %148 = vmatprep.subr.mxu0 0.0
    %149 = vmatpush1.msra.mxu0 0.0
    %150 = vmatprep.subr.mxu0 0.0
    %151 = vmatpush1.msra.mxu0 0.0
    %152 = vmatprep.subr.mxu0 0.0
    %153 = vmatpush1.msra.mxu0 0.0
    %154 = vmatprep.subr.mxu0 0.0
    %155 = vmatpush1.msra.mxu0 0.0
    %156 = vmatprep.subr.mxu0 0.0
    %157 = vmatpush1.msra.mxu0 0.0
    %158 = vmatprep.subr.mxu0 0.0
    %159 = vmatpush1.msra.mxu0 0.0
    %160 = vmatprep.subr.mxu0 0.0
    %161 = vmatpush1.msra.mxu0 0.0
    %162 = vmatprep.subr.mxu0 0.0
    %163 = vmatpush1.msra.mxu0 0.0
    %164 = vmatprep.subr.mxu0 0.0
    %165 = vmatpush1.msra.mxu0 0.0
    %166 = vmatprep.subr.mxu0 0.0
    %167 = vmatpush1.msra.mxu0 0.0
    %168 = vmatprep.subr.mxu0 0.0
    %169 = vmatpush1.msra.mxu0 0.0
    %170 = vmatprep.subr.mxu0 0.0
    %v171 = vand.u32 %v47, 4294901760
    %v172 = vsub.f32 %v47, %v171
    %v173 = vand.u32 %v172, 4294901760
    %v174 = vsub.f32 %v172, %v173
    %v175 = vand.u32 %v174, 4294901760
    %176 = vmatpush1.msra.mxu0 %v175
    %177 = vmatprep.subr.mxu0 0.0
    %v178 = vand.u32 %v46, 4294901760
    %v179 = vsub.f32 %v46, %v178
    %v180 = vand.u32 %v179, 4294901760
    %v181 = vsub.f32 %v179, %v180
    %v182 = vand.u32 %v181, 4294901760
    %183 = vmatpush1.msra.mxu0 %v182
    %184 = vmatprep.subr.mxu0 0.0
    %185 = vmatpush2.msra.mxu0 0.0
    %186 = vmatprep.subr.mxu0 0.0
    %187 = vmatpush2.msra.mxu0 0.0
    %188 = vmatprep.subr.mxu0 0.0
    %189 = vmatpush2.msra.mxu0 0.0
    %190 = vmatprep.subr.mxu0 0.0
    %191 = vmatpush2.msra.mxu0 0.0
    %192 = vmatprep.subr.mxu0 0.0
    %193 = vmatpush2.msra.mxu0 0.0
    %194 = vmatprep.subr.mxu0 0.0
    %195 = vmatpush2.msra.mxu0 0.0
    %196 = vmatprep.subr.mxu0 0.0
    %197 = vmatpush2.msra.mxu0 0.0
    %198 = vmatprep.subr.mxu0 0.0
    %199 = vmatpush2.msra.mxu0 0.0
    %200 = vmatprep.subr.mxu0 0.0
    %201 = vmatpush2.msra.mxu0 0.0
    %202 = vmatprep.subr.mxu0 0.0
    %203 = vmatpush2.msra.mxu0 0.0
    %204 = vmatprep.subr.mxu0 0.0
    %205 = vmatpush2.msra.mxu0 0.0
    %206 = vmatprep.subr.mxu0 0.0
    %207 = vmatpush2.msra.mxu0 0.0
    %208 = vmatprep.subr.mxu0 0.0
    %209 = vmatpush2.msra.mxu0 0.0
    %210 = vmatprep.subr.mxu0 0.0
    %211 = vmatpush2.msra.mxu0 0.0
    %212 = vmatprep.subr.mxu0 0.0
    %213 = vmatpush2.msra.mxu0 0.0
    %214 = vmatprep.subr.mxu0 0.0
    %215 = vmatpush2.msra.mxu0 0.0
    %216 = vmatprep.mubr.f32.mxu0 0.0
    %v217 = vand.u32 %v50, 4294901760
    %218 = vmatmul.mubr.f32.gmra.mxu0 %v217
    %v219 = vpop.f32.mrf.mxu0
    %v220 = vadd.f32 %v129, %v219
    %v221 = vpop.f32.mrf.mxu0
    %222 = vmatprep.mubr.f32.mxu0 0.0
    %v223 = vand.u32 %v53, 4294901760
    %224 = vmatmul.mubr.f32.gmra.mxu0 %v223
    %v225 = vpop.f32.mrf.mxu0
    %v226 = vadd.f32 %v139, %v225
    %v227 = vpop.f32.mrf.mxu0
    %228 = vdwg.mxu0
    %229 = vmatprep.subr.mxu0 0.0
    %230 = vmatpush1.msra.mxu0 0.0
    %231 = vmatprep.subr.mxu0 0.0
    %232 = vmatpush1.msra.mxu0 0.0
    %233 = vmatprep.subr.mxu0 0.0
    %234 = vmatpush1.msra.mxu0 0.0
    %235 = vmatprep.subr.mxu0 0.0
    %236 = vmatpush1.msra.mxu0 0.0
    %237 = vmatprep.subr.mxu0 0.0
    %238 = vmatpush1.msra.mxu0 0.0
    %239 = vmatprep.subr.mxu0 0.0
    %240 = vmatpush1.msra.mxu0 0.0
    %241 = vmatprep.subr.mxu0 0.0
    %242 = vmatpush1.msra.mxu0 0.0
    %243 = vmatprep.subr.mxu0 0.0
    %244 = vmatpush1.msra.mxu0 0.0
    %245 = vmatprep.subr.mxu0 0.0
    %246 = vmatpush1.msra.mxu0 0.0
    %247 = vmatprep.subr.mxu0 0.0
    %248 = vmatpush1.msra.mxu0 0.0
    %249 = vmatprep.subr.mxu0 0.0
    %250 = vmatpush1.msra.mxu0 0.0
    %251 = vmatprep.subr.mxu0 0.0
    %252 = vmatpush1.msra.mxu0 0.0
    %253 = vmatprep.subr.mxu0 0.0
    %254 = vmatpush1.msra.mxu0 0.0
    %255 = vmatprep.subr.mxu0 0.0
    %256 = vmatpush1.msra.mxu0 0.0
    %257 = vmatprep.subr.mxu0 0.0
    %v258 = vand.u32 %v47, 4294901760
    %v259 = vsub.f32 %v47, %v258
    %260 = vmatpush1.msra.mxu0 %v259
    %261 = vmatprep.subr.mxu0 0.0
    %v262 = vand.u32 %v46, 4294901760
    %v263 = vsub.f32 %v46, %v262
    %264 = vmatpush1.msra.mxu0 %v263
    %265 = vmatprep.subr.mxu0 0.0
    %266 = vmatpush2.msra.mxu0 0.0
    %267 = vmatprep.subr.mxu0 0.0
    %268 = vmatpush2.msra.mxu0 0.0
    %269 = vmatprep.subr.mxu0 0.0
    %270 = vmatpush2.msra.mxu0 0.0
    %271 = vmatprep.subr.mxu0 0.0
    %272 = vmatpush2.msra.mxu0 0.0
    %273 = vmatprep.subr.mxu0 0.0
    %274 = vmatpush2.msra.mxu0 0.0
    %275 = vmatprep.subr.mxu0 0.0
    %276 = vmatpush2.msra.mxu0 0.0
    %277 = vmatprep.subr.mxu0 0.0
    %278 = vmatpush2.msra.mxu0 0.0
    %279 = vmatprep.subr.mxu0 0.0
    %280 = vmatpush2.msra.mxu0 0.0
    %281 = vmatprep.subr.mxu0 0.0
    %282 = vmatpush2.msra.mxu0 0.0
    %283 = vmatprep.subr.mxu0 0.0
    %284 = vmatpush2.msra.mxu0 0.0
    %285 = vmatprep.subr.mxu0 0.0
    %286 = vmatpush2.msra.mxu0 0.0
    %287 = vmatprep.subr.mxu0 0.0
    %288 = vmatpush2.msra.mxu0 0.0
    %289 = vmatprep.subr.mxu0 0.0
    %290 = vmatpush2.msra.mxu0 0.0
    %291 = vmatprep.subr.mxu0 0.0
    %292 = vmatpush2.msra.mxu0 0.0
    %293 = vmatprep.subr.mxu0 0.0
    %294 = vmatpush2.msra.mxu0 0.0
    %295 = vmatprep.subr.mxu0 0.0
    %296 = vmatpush2.msra.mxu0 0.0
    %297 = vmatprep.mubr.f32.mxu0 0.0
    %v298 = vand.u32 %v50, 4294901760
    %v299 = vsub.f32 %v50, %v298
    %300 = vmatmul.mubr.f32.gmra.mxu0 %v299
    %v301 = vpop.f32.mrf.mxu0
    %v302 = vadd.f32 %v220, %v301
    %v303 = vpop.f32.mrf.mxu0
    %304 = vmatprep.mubr.f32.mxu0 0.0
    %v305 = vand.u32 %v53, 4294901760
    %v306 = vsub.f32 %v53, %v305
    %307 = vmatmul.mubr.f32.gmra.mxu0 %v306
    %v308 = vpop.f32.mrf.mxu0
    %v309 = vadd.f32 %v226, %v308
    %v310 = vpop.f32.mrf.mxu0
    %311 = vdwg.mxu0
    %312 = vmatprep.subr.mxu0 0.0
    %313 = vmatpush1.msra.mxu0 0.0
    %314 = vmatprep.subr.mxu0 0.0
    %315 = vmatpush1.msra.mxu0 0.0
    %316 = vmatprep.subr.mxu0 0.0
    %317 = vmatpush1.msra.mxu0 0.0
    %318 = vmatprep.subr.mxu0 0.0
    %319 = vmatpush1.msra.mxu0 0.0
    %320 = vmatprep.subr.mxu0 0.0
    %321 = vmatpush1.msra.mxu0 0.0
    %322 = vmatprep.subr.mxu0 0.0
    %323 = vmatpush1.msra.mxu0 0.0
    %324 = vmatprep.subr.mxu0 0.0
    %325 = vmatpush1.msra.mxu0 0.0
    %326 = vmatprep.subr.mxu0 0.0
    %327 = vmatpush1.msra.mxu0 0.0
    %328 = vmatprep.subr.mxu0 0.0
    %329 = vmatpush1.msra.mxu0 0.0
    %330 = vmatprep.subr.mxu0 0.0
    %331 = vmatpush1.msra.mxu0 0.0
    %332 = vmatprep.subr.mxu0 0.0
    %333 = vmatpush1.msra.mxu0 0.0
    %334 = vmatprep.subr.mxu0 0.0
    %335 = vmatpush1.msra.mxu0 0.0
    %336 = vmatprep.subr.mxu0 0.0
    %337 = vmatpush1.msra.mxu0 0.0
    %338 = vmatprep.subr.mxu0 0.0
    %339 = vmatpush1.msra.mxu0 0.0
    %340 = vmatprep.subr.mxu0 0.0
    %v341 = vand.u32 %v47, 4294901760
    %342 = vmatpush1.msra.mxu0 %v341
    %343 = vmatprep.subr.mxu0 0.0
    %v344 = vand.u32 %v46, 4294901760
    %345 = vmatpush1.msra.mxu0 %v344
    %346 = vmatprep.subr.mxu0 0.0
    %347 = vmatpush2.msra.mxu0 0.0
    %348 = vmatprep.subr.mxu0 0.0
    %349 = vmatpush2.msra.mxu0 0.0
    %350 = vmatprep.subr.mxu0 0.0
    %351 = vmatpush2.msra.mxu0 0.0
    %352 = vmatprep.subr.mxu0 0.0
    %353 = vmatpush2.msra.mxu0 0.0
    %354 = vmatprep.subr.mxu0 0.0
    %355 = vmatpush2.msra.mxu0 0.0
    %356 = vmatprep.subr.mxu0 0.0
    %357 = vmatpush2.msra.mxu0 0.0
    %358 = vmatprep.subr.mxu0 0.0
    %359 = vmatpush2.msra.mxu0 0.0
    %360 = vmatprep.subr.mxu0 0.0
    %361 = vmatpush2.msra.mxu0 0.0
    %362 = vmatprep.subr.mxu0 0.0
    %363 = vmatpush2.msra.mxu0 0.0
    %364 = vmatprep.subr.mxu0 0.0
    %365 = vmatpush2.msra.mxu0 0.0
    %366 = vmatprep.subr.mxu0 0.0
    %367 = vmatpush2.msra.mxu0 0.0
    %368 = vmatprep.subr.mxu0 0.0
    %369 = vmatpush2.msra.mxu0 0.0
    %370 = vmatprep.subr.mxu0 0.0
    %371 = vmatpush2.msra.mxu0 0.0
    %372 = vmatprep.subr.mxu0 0.0
    %373 = vmatpush2.msra.mxu0 0.0
    %374 = vmatprep.subr.mxu0 0.0
    %375 = vmatpush2.msra.mxu0 0.0
    %376 = vmatprep.subr.mxu0 0.0
    %377 = vmatpush2.msra.mxu0 0.0
    %378 = vmatprep.mubr.f32.mxu0 0.0
    %v379 = vand.u32 %v50, 4294901760
    %v380 = vsub.f32 %v50, %v379
    %v381 = vand.u32 %v380, 4294901760
    %382 = vmatmul.mubr.f32.gmra.mxu0 %v381
    %v383 = vpop.f32.mrf.mxu0
    %v384 = vadd.f32 %v302, %v383
    %v385 = vpop.f32.mrf.mxu0
    %386 = vmatprep.mubr.f32.mxu0 0.0
    %v387 = vand.u32 %v53, 4294901760
    %v388 = vsub.f32 %v53, %v387
    %v389 = vand.u32 %v388, 4294901760
    %390 = vmatmul.mubr.f32.gmra.mxu0 %v389
    %v391 = vpop.f32.mrf.mxu0
    %v392 = vadd.f32 %v309, %v391
    %v393 = vpop.f32.mrf.mxu0
    %394 = vdwg.mxu0
    %395 = vmatprep.subr.mxu0 0.0
    %396 = vmatpush1.msra.mxu0 0.0
    %397 = vmatprep.subr.mxu0 0.0
    %398 = vmatpush1.msra.mxu0 0.0
    %399 = vmatprep.subr.mxu0 0.0
    %400 = vmatpush1.msra.mxu0 0.0
    %401 = vmatprep.subr.mxu0 0.0
    %402 = vmatpush1.msra.mxu0 0.0
    %403 = vmatprep.subr.mxu0 0.0
    %404 = vmatpush1.msra.mxu0 0.0
    %405 = vmatprep.subr.mxu0 0.0
    %406 = vmatpush1.msra.mxu0 0.0
    %407 = vmatprep.subr.mxu0 0.0
    %408 = vmatpush1.msra.mxu0 0.0
    %409 = vmatprep.subr.mxu0 0.0
    %410 = vmatpush1.msra.mxu0 0.0
    %411 = vmatprep.subr.mxu0 0.0
    %412 = vmatpush1.msra.mxu0 0.0
    %413 = vmatprep.subr.mxu0 0.0
    %414 = vmatpush1.msra.mxu0 0.0
    %415 = vmatprep.subr.mxu0 0.0
    %416 = vmatpush1.msra.mxu0 0.0
    %417 = vmatprep.subr.mxu0 0.0
    %418 = vmatpush1.msra.mxu0 0.0
    %419 = vmatprep.subr.mxu0 0.0
    %420 = vmatpush1.msra.mxu0 0.0
    %421 = vmatprep.subr.mxu0 0.0
    %422 = vmatpush1.msra.mxu0 0.0
    %423 = vmatprep.subr.mxu0 0.0
    %v424 = vand.u32 %v47, 4294901760
    %v425 = vsub.f32 %v47, %v424
    %v426 = vand.u32 %v425, 4294901760
    %427 = vmatpush1.msra.mxu0 %v426
    %428 = vmatprep.subr.mxu0 0.0
    %v429 = vand.u32 %v46, 4294901760
    %v430 = vsub.f32 %v46, %v429
    %v431 = vand.u32 %v430, 4294901760
    %432 = vmatpush1.msra.mxu0 %v431
    %433 = vmatprep.subr.mxu0 0.0
    %434 = vmatpush2.msra.mxu0 0.0
    %435 = vmatprep.subr.mxu0 0.0
    %436 = vmatpush2.msra.mxu0 0.0
    %437 = vmatprep.subr.mxu0 0.0
    %438 = vmatpush2.msra.mxu0 0.0
    %439 = vmatprep.subr.mxu0 0.0
    %440 = vmatpush2.msra.mxu0 0.0
    %441 = vmatprep.subr.mxu0 0.0
    %442 = vmatpush2.msra.mxu0 0.0
    %443 = vmatprep.subr.mxu0 0.0
    %444 = vmatpush2.msra.mxu0 0.0
    %445 = vmatprep.subr.mxu0 0.0
    %446 = vmatpush2.msra.mxu0 0.0
    %447 = vmatprep.subr.mxu0 0.0
    %448 = vmatpush2.msra.mxu0 0.0
    %449 = vmatprep.subr.mxu0 0.0
    %450 = vmatpush2.msra.mxu0 0.0
    %451 = vmatprep.subr.mxu0 0.0
    %452 = vmatpush2.msra.mxu0 0.0
    %453 = vmatprep.subr.mxu0 0.0
    %454 = vmatpush2.msra.mxu0 0.0
    %455 = vmatprep.subr.mxu0 0.0
    %456 = vmatpush2.msra.mxu0 0.0
    %457 = vmatprep.subr.mxu0 0.0
    %458 = vmatpush2.msra.mxu0 0.0
    %459 = vmatprep.subr.mxu0 0.0
    %460 = vmatpush2.msra.mxu0 0.0
    %461 = vmatprep.subr.mxu0 0.0
    %462 = vmatpush2.msra.mxu0 0.0
    %463 = vmatprep.subr.mxu0 0.0
    %464 = vmatpush2.msra.mxu0 0.0
    %465 = vmatprep.mubr.f32.mxu0 0.0
    %v466 = vand.u32 %v50, 4294901760
    %467 = vmatmul.mubr.f32.gmra.mxu0 %v466
    %v468 = vpop.f32.mrf.mxu0
    %v469 = vadd.f32 %v384, %v468
    %v470 = vpop.f32.mrf.mxu0
    %471 = vmatprep.mubr.f32.mxu0 0.0
    %v472 = vand.u32 %v53, 4294901760
    %473 = vmatmul.mubr.f32.gmra.mxu0 %v472
    %v474 = vpop.f32.mrf.mxu0
    %v475 = vadd.f32 %v392, %v474
    %v476 = vpop.f32.mrf.mxu0
    %477 = vdwg.mxu0
    %478 = vmatprep.subr.mxu0 0.0
    %479 = vmatpush1.msra.mxu0 0.0
    %480 = vmatprep.subr.mxu0 0.0
    %481 = vmatpush1.msra.mxu0 0.0
    %482 = vmatprep.subr.mxu0 0.0
    %483 = vmatpush1.msra.mxu0 0.0
    %484 = vmatprep.subr.mxu0 0.0
    %485 = vmatpush1.msra.mxu0 0.0
    %486 = vmatprep.subr.mxu0 0.0
    %487 = vmatpush1.msra.mxu0 0.0
    %488 = vmatprep.subr.mxu0 0.0
    %489 = vmatpush1.msra.mxu0 0.0
    %490 = vmatprep.subr.mxu0 0.0
    %491 = vmatpush1.msra.mxu0 0.0
    %492 = vmatprep.subr.mxu0 0.0
    %493 = vmatpush1.msra.mxu0 0.0
    %494 = vmatprep.subr.mxu0 0.0
    %495 = vmatpush1.msra.mxu0 0.0
    %496 = vmatprep.subr.mxu0 0.0
    %497 = vmatpush1.msra.mxu0 0.0
    %498 = vmatprep.subr.mxu0 0.0
    %499 = vmatpush1.msra.mxu0 0.0
    %500 = vmatprep.subr.mxu0 0.0
    %501 = vmatpush1.msra.mxu0 0.0
    %502 = vmatprep.subr.mxu0 0.0
    %503 = vmatpush1.msra.mxu0 0.0
    %504 = vmatprep.subr.mxu0 0.0
    %505 = vmatpush1.msra.mxu0 0.0
    %506 = vmatprep.subr.mxu0 0.0
    %v507 = vand.u32 %v47, 4294901760
    %508 = vmatpush1.msra.mxu0 %v507
    %509 = vmatprep.subr.mxu0 0.0
    %v510 = vand.u32 %v46, 4294901760
    %511 = vmatpush1.msra.mxu0 %v510
    %512 = vmatprep.subr.mxu0 0.0
    %513 = vmatpush2.msra.mxu0 0.0
    %514 = vmatprep.subr.mxu0 0.0
    %515 = vmatpush2.msra.mxu0 0.0
    %516 = vmatprep.subr.mxu0 0.0
    %517 = vmatpush2.msra.mxu0 0.0
    %518 = vmatprep.subr.mxu0 0.0
    %519 = vmatpush2.msra.mxu0 0.0
    %520 = vmatprep.subr.mxu0 0.0
    %521 = vmatpush2.msra.mxu0 0.0
    %522 = vmatprep.subr.mxu0 0.0
    %523 = vmatpush2.msra.mxu0 0.0
    %524 = vmatprep.subr.mxu0 0.0
    %525 = vmatpush2.msra.mxu0 0.0
    %526 = vmatprep.subr.mxu0 0.0
    %527 = vmatpush2.msra.mxu0 0.0
    %528 = vmatprep.subr.mxu0 0.0
    %529 = vmatpush2.msra.mxu0 0.0
    %530 = vmatprep.subr.mxu0 0.0
    %531 = vmatpush2.msra.mxu0 0.0
    %532 = vmatprep.subr.mxu0 0.0
    %533 = vmatpush2.msra.mxu0 0.0
    %534 = vmatprep.subr.mxu0 0.0
    %535 = vmatpush2.msra.mxu0 0.0
    %536 = vmatprep.subr.mxu0 0.0
    %537 = vmatpush2.msra.mxu0 0.0
    %538 = vmatprep.subr.mxu0 0.0
    %539 = vmatpush2.msra.mxu0 0.0
    %540 = vmatprep.subr.mxu0 0.0
    %541 = vmatpush2.msra.mxu0 0.0
    %542 = vmatprep.subr.mxu0 0.0
    %543 = vmatpush2.msra.mxu0 0.0
    %544 = vmatprep.mubr.f32.mxu0 0.0
    %v545 = vand.u32 %v50, 4294901760
    %546 = vmatmul.mubr.f32.gmra.mxu0 %v545
    %v547 = vpop.f32.mrf.mxu0
    %v548 = vadd.f32 %v469, %v547
    %v549 = vpop.f32.mrf.mxu0
    %550 = vmatprep.mubr.f32.mxu0 0.0
    %v551 = vand.u32 %v53, 4294901760
    %552 = vmatmul.mubr.f32.gmra.mxu0 %v551
    %v553 = vpop.f32.mrf.mxu0
    %v554 = vadd.f32 %v475, %v553
    %v555 = vpop.f32.mrf.mxu0
    %556 = vdwg.mxu0
    %vm557 = vcmask 785408
    %558 = vst.msk [vmem:[%s3] sm:$0xff] %vm557, %v548
    %559 = vst.msk [vmem:[%s3 + $0x8] sm:$0xff] %vm557, %v554
    %v560 = vld [vmem:[#allocation2] sm:$0xff]
    %v561 = vld [vmem:[#allocation2 + $0x8] sm:$0xff]
    %562 = vmatprep.subr.mxu0 0.0
    %563 = vmatpush1.msra.mxu0 0.0
    %564 = vmatprep.subr.mxu0 0.0
    %565 = vmatpush1.msra.mxu0 0.0
    %566 = vmatprep.subr.mxu0 0.0
    %567 = vmatpush1.msra.mxu0 0.0
    %568 = vmatprep.subr.mxu0 0.0
    %569 = vmatpush1.msra.mxu0 0.0
    %570 = vmatprep.subr.mxu0 0.0
    %571 = vmatpush1.msra.mxu0 0.0
    %572 = vmatprep.subr.mxu0 0.0
    %573 = vmatpush1.msra.mxu0 0.0
    %574 = vmatprep.subr.mxu0 0.0
    %575 = vmatpush1.msra.mxu0 0.0
    %576 = vmatprep.subr.mxu0 0.0
    %577 = vmatpush1.msra.mxu0 0.0
    %578 = vmatprep.subr.mxu0 0.0
    %579 = vmatpush1.msra.mxu0 0.0
    %580 = vmatprep.subr.mxu0 0.0
    %581 = vmatpush1.msra.mxu0 0.0
    %582 = vmatprep.subr.mxu0 0.0
    %583 = vmatpush1.msra.mxu0 0.0
    %584 = vmatprep.subr.mxu0 0.0
    %585 = vmatpush1.msra.mxu0 0.0
    %586 = vmatprep.subr.mxu0 0.0
    %587 = vmatpush1.msra.mxu0 0.0
    %588 = vmatprep.subr.mxu0 0.0
    %589 = vmatpush1.msra.mxu0 0.0
    %590 = vmatprep.subr.mxu0 0.0
    %v591 = vand.u32 %v561, 4294901760
    %592 = vmatpush1.msra.mxu0 %v591
    %593 = vmatprep.subr.mxu0 0.0
    %v594 = vand.u32 %v560, 4294901760
    %595 = vmatpush1.msra.mxu0 %v594
    %596 = vmatprep.subr.mxu0 0.0
    %597 = vmatpush2.msra.mxu0 0.0
    %598 = vmatprep.subr.mxu0 0.0
    %599 = vmatpush2.msra.mxu0 0.0
    %600 = vmatprep.subr.mxu0 0.0
    %601 = vmatpush2.msra.mxu0 0.0
    %602 = vmatprep.subr.mxu0 0.0
    %603 = vmatpush2.msra.mxu0 0.0
    %604 = vmatprep.subr.mxu0 0.0
    %605 = vmatpush2.msra.mxu0 0.0
    %606 = vmatprep.subr.mxu0 0.0
    %607 = vmatpush2.msra.mxu0 0.0
    %608 = vmatprep.subr.mxu0 0.0
    %609 = vmatpush2.msra.mxu0 0.0
    %610 = vmatprep.subr.mxu0 0.0
    %611 = vmatpush2.msra.mxu0 0.0
    %612 = vmatprep.subr.mxu0 0.0
    %613 = vmatpush2.msra.mxu0 0.0
    %614 = vmatprep.subr.mxu0 0.0
    %615 = vmatpush2.msra.mxu0 0.0
    %616 = vmatprep.subr.mxu0 0.0
    %617 = vmatpush2.msra.mxu0 0.0
    %618 = vmatprep.subr.mxu0 0.0
    %619 = vmatpush2.msra.mxu0 0.0
    %620 = vmatprep.subr.mxu0 0.0
    %621 = vmatpush2.msra.mxu0 0.0
    %622 = vmatprep.subr.mxu0 0.0
    %623 = vmatpush2.msra.mxu0 0.0
    %624 = vmatprep.subr.mxu0 0.0
    %625 = vmatpush2.msra.mxu0 0.0
    %626 = vmatprep.subr.mxu0 0.0
    %627 = vmatpush2.msra.mxu0 0.0
    %628 = vmatprep.mubr.f32.mxu0 0.0
    %v629 = vand.u32 %v50, 4294901760
    %v630 = vsub.f32 %v50, %v629
    %v631 = vand.u32 %v630, 4294901760
    %v632 = vsub.f32 %v630, %v631
    %v633 = vand.u32 %v632, 4294901760
    %634 = vmatmul.mubr.f32.gmra.mxu0 %v633
    %v635 = vpop.f32.mrf.mxu0
    %v636 = vadd.f32 0.0, %v635
    %v637 = vpop.f32.mrf.mxu0
    %638 = vmatprep.mubr.f32.mxu0 0.0
    %v639 = vand.u32 %v53, 4294901760
    %v640 = vsub.f32 %v53, %v639
    %v641 = vand.u32 %v640, 4294901760
    %v642 = vsub.f32 %v640, %v641
    %v643 = vand.u32 %v642, 4294901760
    %644 = vmatmul.mubr.f32.gmra.mxu0 %v643
    %v645 = vpop.f32.mrf.mxu0
    %v646 = vadd.f32 0.0, %v645
    %v647 = vpop.f32.mrf.mxu0
    %648 = vdwg.mxu0
    %649 = vmatprep.subr.mxu0 0.0
    %650 = vmatpush1.msra.mxu0 0.0
    %651 = vmatprep.subr.mxu0 0.0
    %652 = vmatpush1.msra.mxu0 0.0
    %653 = vmatprep.subr.mxu0 0.0
    %654 = vmatpush1.msra.mxu0 0.0
    %655 = vmatprep.subr.mxu0 0.0
    %656 = vmatpush1.msra.mxu0 0.0
    %657 = vmatprep.subr.mxu0 0.0
    %658 = vmatpush1.msra.mxu0 0.0
    %659 = vmatprep.subr.mxu0 0.0
    %660 = vmatpush1.msra.mxu0 0.0
    %661 = vmatprep.subr.mxu0 0.0
    %662 = vmatpush1.msra.mxu0 0.0
    %663 = vmatprep.subr.mxu0 0.0
    %664 = vmatpush1.msra.mxu0 0.0
    %665 = vmatprep.subr.mxu0 0.0
    %666 = vmatpush1.msra.mxu0 0.0
    %667 = vmatprep.subr.mxu0 0.0
    %668 = vmatpush1.msra.mxu0 0.0
    %669 = vmatprep.subr.mxu0 0.0
    %670 = vmatpush1.msra.mxu0 0.0
    %671 = vmatprep.subr.mxu0 0.0
    %672 = vmatpush1.msra.mxu0 0.0
    %673 = vmatprep.subr.mxu0 0.0
    %674 = vmatpush1.msra.mxu0 0.0
    %675 = vmatprep.subr.mxu0 0.0
    %676 = vmatpush1.msra.mxu0 0.0
    %677 = vmatprep.subr.mxu0 0.0
    %v678 = vand.u32 %v561, 4294901760
    %v679 = vsub.f32 %v561, %v678
    %v680 = vand.u32 %v679, 4294901760
    %v681 = vsub.f32 %v679, %v680
    %v682 = vand.u32 %v681, 4294901760
    %683 = vmatpush1.msra.mxu0 %v682
    %684 = vmatprep.subr.mxu0 0.0
    %v685 = vand.u32 %v560, 4294901760
    %v686 = vsub.f32 %v560, %v685
    %v687 = vand.u32 %v686, 4294901760
    %v688 = vsub.f32 %v686, %v687
    %v689 = vand.u32 %v688, 4294901760
    %690 = vmatpush1.msra.mxu0 %v689
    %691 = vmatprep.subr.mxu0 0.0
    %692 = vmatpush2.msra.mxu0 0.0
    %693 = vmatprep.subr.mxu0 0.0
    %694 = vmatpush2.msra.mxu0 0.0
    %695 = vmatprep.subr.mxu0 0.0
    %696 = vmatpush2.msra.mxu0 0.0
    %697 = vmatprep.subr.mxu0 0.0
    %698 = vmatpush2.msra.mxu0 0.0
    %699 = vmatprep.subr.mxu0 0.0
    %700 = vmatpush2.msra.mxu0 0.0
    %701 = vmatprep.subr.mxu0 0.0
    %702 = vmatpush2.msra.mxu0 0.0
    %703 = vmatprep.subr.mxu0 0.0
    %704 = vmatpush2.msra.mxu0 0.0
    %705 = vmatprep.subr.mxu0 0.0
    %706 = vmatpush2.msra.mxu0 0.0
    %707 = vmatprep.subr.mxu0 0.0
    %708 = vmatpush2.msra.mxu0 0.0
    %709 = vmatprep.subr.mxu0 0.0
    %710 = vmatpush2.msra.mxu0 0.0
    %711 = vmatprep.subr.mxu0 0.0
    %712 = vmatpush2.msra.mxu0 0.0
    %713 = vmatprep.subr.mxu0 0.0
    %714 = vmatpush2.msra.mxu0 0.0
    %715 = vmatprep.subr.mxu0 0.0
    %716 = vmatpush2.msra.mxu0 0.0
    %717 = vmatprep.subr.mxu0 0.0
    %718 = vmatpush2.msra.mxu0 0.0
    %719 = vmatprep.subr.mxu0 0.0
    %720 = vmatpush2.msra.mxu0 0.0
    %721 = vmatprep.subr.mxu0 0.0
    %722 = vmatpush2.msra.mxu0 0.0
    %723 = vmatprep.mubr.f32.mxu0 0.0
    %v724 = vand.u32 %v50, 4294901760
    %725 = vmatmul.mubr.f32.gmra.mxu0 %v724
    %v726 = vpop.f32.mrf.mxu0
    %v727 = vadd.f32 %v636, %v726
    %v728 = vpop.f32.mrf.mxu0
    %729 = vmatprep.mubr.f32.mxu0 0.0
    %v730 = vand.u32 %v53, 4294901760
    %731 = vmatmul.mubr.f32.gmra.mxu0 %v730
    %v732 = vpop.f32.mrf.mxu0
    %v733 = vadd.f32 %v646, %v732
    %v734 = vpop.f32.mrf.mxu0
    %735 = vdwg.mxu0
    %736 = vmatprep.subr.mxu0 0.0
    %737 = vmatpush1.msra.mxu0 0.0
    %738 = vmatprep.subr.mxu0 0.0
    %739 = vmatpush1.msra.mxu0 0.0
    %740 = vmatprep.subr.mxu0 0.0
    %741 = vmatpush1.msra.mxu0 0.0
    %742 = vmatprep.subr.mxu0 0.0
    %743 = vmatpush1.msra.mxu0 0.0
    %744 = vmatprep.subr.mxu0 0.0
    %745 = vmatpush1.msra.mxu0 0.0
    %746 = vmatprep.subr.mxu0 0.0
    %747 = vmatpush1.msra.mxu0 0.0
    %748 = vmatprep.subr.mxu0 0.0
    %749 = vmatpush1.msra.mxu0 0.0
    %750 = vmatprep.subr.mxu0 0.0
    %751 = vmatpush1.msra.mxu0 0.0
    %752 = vmatprep.subr.mxu0 0.0
    %753 = vmatpush1.msra.mxu0 0.0
    %754 = vmatprep.subr.mxu0 0.0
    %755 = vmatpush1.msra.mxu0 0.0
    %756 = vmatprep.subr.mxu0 0.0
    %757 = vmatpush1.msra.mxu0 0.0
    %758 = vmatprep.subr.mxu0 0.0
    %759 = vmatpush1.msra.mxu0 0.0
    %760 = vmatprep.subr.mxu0 0.0
    %761 = vmatpush1.msra.mxu0 0.0
    %762 = vmatprep.subr.mxu0 0.0
    %763 = vmatpush1.msra.mxu0 0.0
    %764 = vmatprep.subr.mxu0 0.0
    %v765 = vand.u32 %v561, 4294901760
    %v766 = vsub.f32 %v561, %v765
    %767 = vmatpush1.msra.mxu0 %v766
    %768 = vmatprep.subr.mxu0 0.0
    %v769 = vand.u32 %v560, 4294901760
    %v770 = vsub.f32 %v560, %v769
    %771 = vmatpush1.msra.mxu0 %v770
    %772 = vmatprep.subr.mxu0 0.0
    %773 = vmatpush2.msra.mxu0 0.0
    %774 = vmatprep.subr.mxu0 0.0
    %775 = vmatpush2.msra.mxu0 0.0
    %776 = vmatprep.subr.mxu0 0.0
    %777 = vmatpush2.msra.mxu0 0.0
    %778 = vmatprep.subr.mxu0 0.0
    %779 = vmatpush2.msra.mxu0 0.0
    %780 = vmatprep.subr.mxu0 0.0
    %781 = vmatpush2.msra.mxu0 0.0
    %782 = vmatprep.subr.mxu0 0.0
    %783 = vmatpush2.msra.mxu0 0.0
    %784 = vmatprep.subr.mxu0 0.0
    %785 = vmatpush2.msra.mxu0 0.0
    %786 = vmatprep.subr.mxu0 0.0
    %787 = vmatpush2.msra.mxu0 0.0
    %788 = vmatprep.subr.mxu0 0.0
    %789 = vmatpush2.msra.mxu0 0.0
    %790 = vmatprep.subr.mxu0 0.0
    %791 = vmatpush2.msra.mxu0 0.0
    %792 = vmatprep.subr.mxu0 0.0
    %793 = vmatpush2.msra.mxu0 0.0
    %794 = vmatprep.subr.mxu0 0.0
    %795 = vmatpush2.msra.mxu0 0.0
    %796 = vmatprep.subr.mxu0 0.0
    %797 = vmatpush2.msra.mxu0 0.0
    %798 = vmatprep.subr.mxu0 0.0
    %799 = vmatpush2.msra.mxu0 0.0
    %800 = vmatprep.subr.mxu0 0.0
    %801 = vmatpush2.msra.mxu0 0.0
    %802 = vmatprep.subr.mxu0 0.0
    %803 = vmatpush2.msra.mxu0 0.0
    %804 = vmatprep.mubr.f32.mxu0 0.0
    %v805 = vand.u32 %v50, 4294901760
    %v806 = vsub.f32 %v50, %v805
    %807 = vmatmul.mubr.f32.gmra.mxu0 %v806
    %v808 = vpop.f32.mrf.mxu0
    %v809 = vadd.f32 %v727, %v808
    %v810 = vpop.f32.mrf.mxu0
    %811 = vmatprep.mubr.f32.mxu0 0.0
    %v812 = vand.u32 %v53, 4294901760
    %v813 = vsub.f32 %v53, %v812
    %814 = vmatmul.mubr.f32.gmra.mxu0 %v813
    %v815 = vpop.f32.mrf.mxu0
    %v816 = vadd.f32 %v733, %v815
    %v817 = vpop.f32.mrf.mxu0
    %818 = vdwg.mxu0
    %819 = vmatprep.subr.mxu0 0.0
    %820 = vmatpush1.msra.mxu0 0.0
    %821 = vmatprep.subr.mxu0 0.0
    %822 = vmatpush1.msra.mxu0 0.0
    %823 = vmatprep.subr.mxu0 0.0
    %824 = vmatpush1.msra.mxu0 0.0
    %825 = vmatprep.subr.mxu0 0.0
    %826 = vmatpush1.msra.mxu0 0.0
    %827 = vmatprep.subr.mxu0 0.0
    %828 = vmatpush1.msra.mxu0 0.0
    %829 = vmatprep.subr.mxu0 0.0
    %830 = vmatpush1.msra.mxu0 0.0
    %831 = vmatprep.subr.mxu0 0.0
    %832 = vmatpush1.msra.mxu0 0.0
    %833 = vmatprep.subr.mxu0 0.0
    %834 = vmatpush1.msra.mxu0 0.0
    %835 = vmatprep.subr.mxu0 0.0
    %836 = vmatpush1.msra.mxu0 0.0
    %837 = vmatprep.subr.mxu0 0.0
    %838 = vmatpush1.msra.mxu0 0.0
    %839 = vmatprep.subr.mxu0 0.0
    %840 = vmatpush1.msra.mxu0 0.0
    %841 = vmatprep.subr.mxu0 0.0
    %842 = vmatpush1.msra.mxu0 0.0
    %843 = vmatprep.subr.mxu0 0.0
    %844 = vmatpush1.msra.mxu0 0.0
    %845 = vmatprep.subr.mxu0 0.0
    %846 = vmatpush1.msra.mxu0 0.0
    %847 = vmatprep.subr.mxu0 0.0
    %v848 = vand.u32 %v561, 4294901760
    %849 = vmatpush1.msra.mxu0 %v848
    %850 = vmatprep.subr.mxu0 0.0
    %v851 = vand.u32 %v560, 4294901760
    %852 = vmatpush1.msra.mxu0 %v851
    %853 = vmatprep.subr.mxu0 0.0
    %854 = vmatpush2.msra.mxu0 0.0
    %855 = vmatprep.subr.mxu0 0.0
    %856 = vmatpush2.msra.mxu0 0.0
    %857 = vmatprep.subr.mxu0 0.0
    %858 = vmatpush2.msra.mxu0 0.0
    %859 = vmatprep.subr.mxu0 0.0
    %860 = vmatpush2.msra.mxu0 0.0
    %861 = vmatprep.subr.mxu0 0.0
    %862 = vmatpush2.msra.mxu0 0.0
    %863 = vmatprep.subr.mxu0 0.0
    %864 = vmatpush2.msra.mxu0 0.0
    %865 = vmatprep.subr.mxu0 0.0
    %866 = vmatpush2.msra.mxu0 0.0
    %867 = vmatprep.subr.mxu0 0.0
    %868 = vmatpush2.msra.mxu0 0.0
    %869 = vmatprep.subr.mxu0 0.0
    %870 = vmatpush2.msra.mxu0 0.0
    %871 = vmatprep.subr.mxu0 0.0
    %872 = vmatpush2.msra.mxu0 0.0
    %873 = vmatprep.subr.mxu0 0.0
    %874 = vmatpush2.msra.mxu0 0.0
    %875 = vmatprep.subr.mxu0 0.0
    %876 = vmatpush2.msra.mxu0 0.0
    %877 = vmatprep.subr.mxu0 0.0
    %878 = vmatpush2.msra.mxu0 0.0
    %879 = vmatprep.subr.mxu0 0.0
    %880 = vmatpush2.msra.mxu0 0.0
    %881 = vmatprep.subr.mxu0 0.0
    %882 = vmatpush2.msra.mxu0 0.0
    %883 = vmatprep.subr.mxu0 0.0
    %884 = vmatpush2.msra.mxu0 0.0
    %885 = vmatprep.mubr.f32.mxu0 0.0
    %v886 = vand.u32 %v50, 4294901760
    %v887 = vsub.f32 %v50, %v886
    %v888 = vand.u32 %v887, 4294901760
    %889 = vmatmul.mubr.f32.gmra.mxu0 %v888
    %v890 = vpop.f32.mrf.mxu0
    %v891 = vadd.f32 %v809, %v890
    %v892 = vpop.f32.mrf.mxu0
    %893 = vmatprep.mubr.f32.mxu0 0.0
    %v894 = vand.u32 %v53, 4294901760
    %v895 = vsub.f32 %v53, %v894
    %v896 = vand.u32 %v895, 4294901760
    %897 = vmatmul.mubr.f32.gmra.mxu0 %v896
    %v898 = vpop.f32.mrf.mxu0
    %v899 = vadd.f32 %v816, %v898
    %v900 = vpop.f32.mrf.mxu0
    %901 = vdwg.mxu0
    %902 = vmatprep.subr.mxu0 0.0
    %903 = vmatpush1.msra.mxu0 0.0
    %904 = vmatprep.subr.mxu0 0.0
    %905 = vmatpush1.msra.mxu0 0.0
    %906 = vmatprep.subr.mxu0 0.0
    %907 = vmatpush1.msra.mxu0 0.0
    %908 = vmatprep.subr.mxu0 0.0
    %909 = vmatpush1.msra.mxu0 0.0
    %910 = vmatprep.subr.mxu0 0.0
    %911 = vmatpush1.msra.mxu0 0.0
    %912 = vmatprep.subr.mxu0 0.0
    %913 = vmatpush1.msra.mxu0 0.0
    %914 = vmatprep.subr.mxu0 0.0
    %915 = vmatpush1.msra.mxu0 0.0
    %916 = vmatprep.subr.mxu0 0.0
    %917 = vmatpush1.msra.mxu0 0.0
    %918 = vmatprep.subr.mxu0 0.0
    %919 = vmatpush1.msra.mxu0 0.0
    %920 = vmatprep.subr.mxu0 0.0
    %921 = vmatpush1.msra.mxu0 0.0
    %922 = vmatprep.subr.mxu0 0.0
    %923 = vmatpush1.msra.mxu0 0.0
    %924 = vmatprep.subr.mxu0 0.0
    %925 = vmatpush1.msra.mxu0 0.0
    %926 = vmatprep.subr.mxu0 0.0
    %927 = vmatpush1.msra.mxu0 0.0
    %928 = vmatprep.subr.mxu0 0.0
    %929 = vmatpush1.msra.mxu0 0.0
    %930 = vmatprep.subr.mxu0 0.0
    %v931 = vand.u32 %v561, 4294901760
    %v932 = vsub.f32 %v561, %v931
    %v933 = vand.u32 %v932, 4294901760
    %934 = vmatpush1.msra.mxu0 %v933
    %935 = vmatprep.subr.mxu0 0.0
    %v936 = vand.u32 %v560, 4294901760
    %v937 = vsub.f32 %v560, %v936
    %v938 = vand.u32 %v937, 4294901760
    %939 = vmatpush1.msra.mxu0 %v938
    %940 = vmatprep.subr.mxu0 0.0
    %941 = vmatpush2.msra.mxu0 0.0
    %942 = vmatprep.subr.mxu0 0.0
    %943 = vmatpush2.msra.mxu0 0.0
    %944 = vmatprep.subr.mxu0 0.0
    %945 = vmatpush2.msra.mxu0 0.0
    %946 = vmatprep.subr.mxu0 0.0
    %947 = vmatpush2.msra.mxu0 0.0
    %948 = vmatprep.subr.mxu0 0.0
    %949 = vmatpush2.msra.mxu0 0.0
    %950 = vmatprep.subr.mxu0 0.0
    %951 = vmatpush2.msra.mxu0 0.0
    %952 = vmatprep.subr.mxu0 0.0
    %953 = vmatpush2.msra.mxu0 0.0
    %954 = vmatprep.subr.mxu0 0.0
    %955 = vmatpush2.msra.mxu0 0.0
    %956 = vmatprep.subr.mxu0 0.0
    %957 = vmatpush2.msra.mxu0 0.0
    %958 = vmatprep.subr.mxu0 0.0
    %959 = vmatpush2.msra.mxu0 0.0
    %960 = vmatprep.subr.mxu0 0.0
    %961 = vmatpush2.msra.mxu0 0.0
    %962 = vmatprep.subr.mxu0 0.0
    %963 = vmatpush2.msra.mxu0 0.0
    %964 = vmatprep.subr.mxu0 0.0
    %965 = vmatpush2.msra.mxu0 0.0
    %966 = vmatprep.subr.mxu0 0.0
    %967 = vmatpush2.msra.mxu0 0.0
    %968 = vmatprep.subr.mxu0 0.0
    %969 = vmatpush2.msra.mxu0 0.0
    %970 = vmatprep.subr.mxu0 0.0
    %971 = vmatpush2.msra.mxu0 0.0
    %972 = vmatprep.mubr.f32.mxu0 0.0
    %v973 = vand.u32 %v50, 4294901760
    %974 = vmatmul.mubr.f32.gmra.mxu0 %v973
    %v975 = vpop.f32.mrf.mxu0
    %v976 = vadd.f32 %v891, %v975
    %v977 = vpop.f32.mrf.mxu0
    %978 = vmatprep.mubr.f32.mxu0 0.0
    %v979 = vand.u32 %v53, 4294901760
    %980 = vmatmul.mubr.f32.gmra.mxu0 %v979
    %v981 = vpop.f32.mrf.mxu0
    %v982 = vadd.f32 %v899, %v981
    %v983 = vpop.f32.mrf.mxu0
    %984 = vdwg.mxu0
    %985 = vmatprep.subr.mxu0 0.0
    %986 = vmatpush1.msra.mxu0 0.0
    %987 = vmatprep.subr.mxu0 0.0
    %988 = vmatpush1.msra.mxu0 0.0
    %989 = vmatprep.subr.mxu0 0.0
    %990 = vmatpush1.msra.mxu0 0.0
    %991 = vmatprep.subr.mxu0 0.0
    %992 = vmatpush1.msra.mxu0 0.0
    %993 = vmatprep.subr.mxu0 0.0
    %994 = vmatpush1.msra.mxu0 0.0
    %995 = vmatprep.subr.mxu0 0.0
    %996 = vmatpush1.msra.mxu0 0.0
    %997 = vmatprep.subr.mxu0 0.0
    %998 = vmatpush1.msra.mxu0 0.0
    %999 = vmatprep.subr.mxu0 0.0
    %1000 = vmatpush1.msra.mxu0 0.0
    %1001 = vmatprep.subr.mxu0 0.0
    %1002 = vmatpush1.msra.mxu0 0.0
    %1003 = vmatprep.subr.mxu0 0.0
    %1004 = vmatpush1.msra.mxu0 0.0
    %1005 = vmatprep.subr.mxu0 0.0
    %1006 = vmatpush1.msra.mxu0 0.0
    %1007 = vmatprep.subr.mxu0 0.0
    %1008 = vmatpush1.msra.mxu0 0.0
    %1009 = vmatprep.subr.mxu0 0.0
    %1010 = vmatpush1.msra.mxu0 0.0
    %1011 = vmatprep.subr.mxu0 0.0
    %1012 = vmatpush1.msra.mxu0 0.0
    %1013 = vmatprep.subr.mxu0 0.0
    %v1014 = vand.u32 %v561, 4294901760
    %1015 = vmatpush1.msra.mxu0 %v1014
    %1016 = vmatprep.subr.mxu0 0.0
    %v1017 = vand.u32 %v560, 4294901760
    %1018 = vmatpush1.msra.mxu0 %v1017
    %1019 = vmatprep.subr.mxu0 0.0
    %1020 = vmatpush2.msra.mxu0 0.0
    %1021 = vmatprep.subr.mxu0 0.0
    %1022 = vmatpush2.msra.mxu0 0.0
    %1023 = vmatprep.subr.mxu0 0.0
    %1024 = vmatpush2.msra.mxu0 0.0
    %1025 = vmatprep.subr.mxu0 0.0
    %1026 = vmatpush2.msra.mxu0 0.0
    %1027 = vmatprep.subr.mxu0 0.0
    %1028 = vmatpush2.msra.mxu0 0.0
    %1029 = vmatprep.subr.mxu0 0.0
    %1030 = vmatpush2.msra.mxu0 0.0
    %1031 = vmatprep.subr.mxu0 0.0
    %1032 = vmatpush2.msra.mxu0 0.0
    %1033 = vmatprep.subr.mxu0 0.0
    %1034 = vmatpush2.msra.mxu0 0.0
    %1035 = vmatprep.subr.mxu0 0.0
    %1036 = vmatpush2.msra.mxu0 0.0
    %1037 = vmatprep.subr.mxu0 0.0
    %1038 = vmatpush2.msra.mxu0 0.0
    %1039 = vmatprep.subr.mxu0 0.0
    %1040 = vmatpush2.msra.mxu0 0.0
    %1041 = vmatprep.subr.mxu0 0.0
    %1042 = vmatpush2.msra.mxu0 0.0
    %1043 = vmatprep.subr.mxu0 0.0
    %1044 = vmatpush2.msra.mxu0 0.0
    %1045 = vmatprep.subr.mxu0 0.0
    %1046 = vmatpush2.msra.mxu0 0.0
    %1047 = vmatprep.subr.mxu0 0.0
    %1048 = vmatpush2.msra.mxu0 0.0
    %1049 = vmatprep.subr.mxu0 0.0
    %1050 = vmatpush2.msra.mxu0 0.0
    %1051 = vmatprep.mubr.f32.mxu0 0.0
    %v1052 = vand.u32 %v50, 4294901760
    %1053 = vmatmul.mubr.f32.gmra.mxu0 %v1052
    %v1054 = vpop.f32.mrf.mxu0
    %v1055 = vadd.f32 %v976, %v1054
    %v1056 = vpop.f32.mrf.mxu0
    %1057 = vmatprep.mubr.f32.mxu0 0.0
    %v1058 = vand.u32 %v53, 4294901760
    %1059 = vmatmul.mubr.f32.gmra.mxu0 %v1058
    %v1060 = vpop.f32.mrf.mxu0
    %v1061 = vadd.f32 %v982, %v1060
    %v1062 = vpop.f32.mrf.mxu0
    %1063 = vdwg.mxu0
    %1064 = vst.msk [vmem:[%s4] sm:$0xff] %vm557, %v1055
    %1065 = vst.msk [vmem:[%s4 + $0x8] sm:$0xff] %vm557, %v1061
    // Predicated region
    $region18: #{entity_encoder_forward.1} parent=1 // pred_check
      _
    $region19: #{entity_encoder_forward.1} parent=1 // pred_check_branch
      %1067 = sbr.rel (0) target = $region21
    $region20: #{entity_encoder_forward.1} parent=1 // pred_region
      _
    $region21: #{entity_encoder_forward.1} parent=1 // pred_fallthru
      _
    // Predicated region
    $region22: #{entity_encoder_forward.1} parent=1 // pred_check
      _
    $region23: #{entity_encoder_forward.1} parent=1 // pred_check_branch
      %1069 = sbr.rel (0) target = $region25
    $region24: #{entity_encoder_forward.1} parent=1 // pred_region
      _
    $region25: #{entity_encoder_forward.1} parent=1 // pred_fallthru
      _
    // Predicated region
    $region26: #{entity_encoder_forward.1} parent=1 // pred_check
      _
    $region27: #{entity_encoder_forward.1} parent=1 // pred_check_branch
      %1071 = sbr.rel (0) target = $region29
    $region28: #{entity_encoder_forward.1} parent=1 // pred_region
      _
    $region29: #{entity_encoder_forward.1} parent=1 // pred_fallthru
      _
    // Predicated region
    $region30: #{entity_encoder_forward.1} parent=1 // pred_check
      _
    $region31: #{entity_encoder_forward.1} parent=1 // pred_check_branch
      %1073 = sbr.rel (0) target = $region33
    $region32: #{entity_encoder_forward.1} parent=1 // pred_region
      _
    $region33: #{entity_encoder_forward.1} parent=1 // pred_fallthru
      _
    %1074 = vsyncpa [#allocation3], 1

</llo_original>
